<compile_context>
chip_gen: v6e
topology: v6e:2x2x1
jax: 0.10.0
libtpu: 0.0.40
codegen_flags: <defaults>
</compile_context>

<pallas_src>
import functools

import numpy as np
import jax
import jax.numpy as jnp
from jax import lax
from jax.experimental import pallas as pl
from jax.experimental.pallas import tpu as pltpu


def skconv_kernel(xs_ref, wfused_ref, wsmall_ref, out_ref, *, M, C, B, Lpad):
    """Whole batch in one step; B is folded into the lane axis of xs/out."""
    MC = M * C
    xs = xs_ref[...]                                   # ((2M+1)*C, B*Lpad) bf16
    wsmall = wsmall_ref[...]                           # (M*C, MC + C + 3) f32
    wfc = wsmall[:, 0:MC]                              # (M*C, M*C) (zero-padded cols >= d)
    wz = wsmall[:, MC:MC + C]                          # (M*C, C)   (zero rows >= d)
    cshift = wsmall[:, MC + C:MC + C + 1]              # (M*C, 1)
    bfc = wsmall[:, MC + C + 1:MC + C + 2]             # (M*C, 1)
    zshift = wsmall[:, MC + C + 2:MC + C + 3]          # (M*C, 1)   (zero rows >= d)

    # ---- all branches / taps / groups / batches in ONE MXU matmul -----------
    # cscale already folded into wfused rows -> only add + ReLU on the hot tile.
    feats = jnp.dot(wfused_ref[...], xs,
                    preferred_element_type=jnp.float32)        # (M*C, B*Lpad)
    feats = jnp.maximum(feats + cshift, 0.0)

    # ---- feats_U = sum over branches ----------------------------------------
    feats_U = feats[0:C, :]
    for i in range(1, M):
        feats_U = feats_U + feats[i * C:(i + 1) * C, :]        # (C, B*Lpad)

    # ---- per-batch: GAP -> fc -> attention -> weighted sum ------------------
    # (1/L, zscale and the lane-padding correction are folded into wz/zshift,
    #  so a raw full-lane sum is correct here.)
    for b in range(B):
        lo, hi = b * Lpad, (b + 1) * Lpad
        s_raw = jnp.sum(feats_U[:, lo:hi], axis=1, keepdims=True)         # (C, 1)
        z = jnp.maximum(jnp.dot(wz, s_raw,
                                preferred_element_type=jnp.float32) + zshift, 0.0)
        logits = jnp.dot(wfc, z,
                         preferred_element_type=jnp.float32) + bfc        # (M*C, 1)

        mx = logits[0:C, :]
        for i in range(1, M):
            mx = jnp.maximum(mx, logits[i * C:(i + 1) * C, :])
        exps = [jnp.exp(logits[i * C:(i + 1) * C, :] - mx) for i in range(M)]
        denom = exps[0]
        for i in range(1, M):
            denom = denom + exps[i]
        inv = pl.reciprocal(denom, approx=True)                 # EUP slot, ~free

        out_b = feats[0:C, lo:hi] * (exps[0] * inv)
        for i in range(1, M):
            out_b = out_b + feats[i * C:(i + 1) * C, lo:hi] * (exps[i] * inv)
        out_ref[:, lo:hi] = out_b.astype(out_ref.dtype)         # 256-lane aligned store


@functools.partial(jax.jit, static_argnames=("M",))
def skconv_forward(x, params, *, M):
    B, C, H, W = x.shape
    assert C % 8 == 0, "C must be a multiple of 8 (f32 sublane-aligned row slices)"
    Wp = W + 2
    L = H * Wp
    Lpad = -(-L // 128) * 128                        # lane-dense flat length per batch
    nwin = 2 * M + 1
    wfused, wsmall = params

    # glue: pad, pre-build the (2M+1) H-shifted windows (no unaligned slices in
    # the kernel), flatten spatial, pad flat axis to 128, fold B into lanes, bf16.
    # TODO(synk): if this layer is scaled up (large C/H/W), build the shifted
    #   windows in VMEM from a single load instead of materializing (2M+1)
    #   copies in HBM (matters most on v5e's lower HBM bandwidth).
    xpad = jnp.pad(x, ((0, 0), (0, 0), (M, M), (1, 1)))
    wins = [xpad[:, :, M + s:M + s + H, :] for s in range(-M, M + 1)]
    xs = jnp.stack(wins, axis=1).reshape(B, nwin * C, L)
    xs = jnp.pad(xs, ((0, 0), (0, 0), (0, Lpad - L)))
    xs = jnp.transpose(xs, (1, 0, 2)).reshape(nwin * C, B * Lpad).astype(jnp.bfloat16)

    kernel = functools.partial(skconv_kernel, M=M, C=C, B=B, Lpad=Lpad)
    out_flat = pl.pallas_call(
        kernel,
        out_shape=jax.ShapeDtypeStruct((C, B * Lpad), jnp.bfloat16),
        grid_spec=pltpu.PrefetchScalarGridSpec(
            num_scalar_prefetch=0,
            grid=(1,),                               # single whole-batch step
            in_specs=[
                pl.BlockSpec((nwin * C, B * Lpad), lambda i: (0, 0)),
                pl.BlockSpec(wfused.shape, lambda i: (0, 0)),
                pl.BlockSpec(wsmall.shape, lambda i: (0, 0)),
            ],
            out_specs=pl.BlockSpec((C, B * Lpad), lambda i: (0, 0)),
        ),
    )(xs, wfused, wsmall)
    # drop lane padding, restore NCHW (PyTorch output width is W+2)
    out = out_flat.reshape(C, B, Lpad)[:, :, :L]
    return out.transpose(1, 0, 2).reshape(B, C, H, Wp).astype(jnp.float32)


def init_params(key, *, C, M, G, d, H, W):
    """Deterministic synthetic parameters (PyTorch __init__ shapes, eval-mode BN),
    pre-folded/packed for the kernel."""
    Cg = C // G
    eps = 1e-5
    Wp = W + 2
    L = H * Wp
    Lpad = -(-L // 128) * 128
    MC = M * C
    ks = jax.random.split(key, 12)

    # grouped conv weights: per branch PyTorch shape (C, C//G, 3, 1)
    wgrp = jax.random.normal(ks[0], (M, C, Cg, 3), jnp.float32) * 0.2
    gamma = 1.0 + 0.1 * jax.random.normal(ks[1], (M, C), jnp.float32)
    beta = 0.1 * jax.random.normal(ks[2], (M, C), jnp.float32)
    rmean = 0.1 * jax.random.normal(ks[3], (M, C), jnp.float32)
    rvar = jax.random.uniform(ks[4], (M, C), jnp.float32, minval=0.5, maxval=1.5)
    cscale = gamma / jnp.sqrt(rvar + eps)
    cshift = beta - rmean * cscale
    # fc: Conv2d(C, d, 1x1, bias=False) + BN(d) + ReLU
    wz = jax.random.normal(ks[5], (d, C), jnp.float32) * 0.2
    zg = 1.0 + 0.1 * jax.random.normal(ks[6], (d,), jnp.float32)
    zb = 0.1 * jax.random.normal(ks[7], (d,), jnp.float32)
    zm = 0.1 * jax.random.normal(ks[8], (d,), jnp.float32)
    zv = jax.random.uniform(ks[9], (d,), jnp.float32, minval=0.5, maxval=1.5)
    zscale = zg / jnp.sqrt(zv + eps)
    zshift = zb - zm * zscale
    # fcs: Conv2d(d, C, 1x1, bias=True) per branch
    wfc = jax.random.normal(ks[10], (M, C, d), jnp.float32) * 0.2
    bfc = 0.1 * jax.random.normal(ks[11], (M, C), jnp.float32)

    # --- fuse M branches, 3 taps and group structure into one dense weight over
    #     the (2M+1) distinct H-shifted input windows; fold cscale in (f32, then bf16).
    # TODO(synk): block-diagonal group expansion is fine while C <= 128; for
    #   large C switch to G per-group matmuls to avoid multiply-by-zero MXU work.
    wg_np = np.asarray(wgrp)
    csc_np = np.asarray(cscale)
    wfused = np.zeros((MC, (2 * M + 1) * C), np.float32)
    for i in range(M):
        dil = i + 1
        for k in range(3):
            blk = (k - 1) * dil + M            # which shifted window this tap reads
            for co in range(C):
                g = co // Cg
                wfused[i * C + co,
                       blk * C + g * Cg:blk * C + (g + 1) * Cg] = (
                    wg_np[i, co, :, k] * csc_np[i, co])
    wfused_bf16 = jnp.asarray(wfused).astype(jnp.bfloat16)

    # --- fold zscale and 1/L into wz; fold the GAP lane-padding correction into
    #     zshift (padded columns of feats_U equal sum_i ReLU(cshift_i) per channel).
    cshift_np = np.asarray(cshift)                                   # (M, C)
    wz_fold = (np.asarray(zscale)[:, None] * np.asarray(wz)) / float(L)   # (d, C)
    corr = (Lpad - L) * np.maximum(cshift_np, 0.0).sum(axis=0)       # (C,)
    zshift_fold = np.asarray(zshift) - wz_fold @ corr                # (d,)

    # --- pack all small params into ONE slab; wz/zshift/wfc are zero-padded to
    #     M*C rows/cols so the kernel needs no sub-8-row slices.
    wz_pad = np.zeros((MC, C), np.float32);      wz_pad[:d] = wz_fold
    zshift_pad = np.zeros((MC, 1), np.float32);  zshift_pad[:d, 0] = zshift_fold
    wfc_pad = np.zeros((MC, MC), np.float32);    wfc_pad[:, :d] = np.asarray(wfc).reshape(MC, d)
    wsmall = np.concatenate(
        [wfc_pad,                                    # cols [0, MC)
         wz_pad,                                     # cols [MC, MC+C)
         cshift_np.reshape(MC, 1),                   # col  MC+C
         np.asarray(bfc).reshape(MC, 1),             # col  MC+C+1
         zshift_pad],                                # col  MC+C+2
        axis=1).astype(np.float32)                   # (MC, MC+C+3)

    kernel_params = (wfused_bf16, jnp.asarray(wsmall))
    ref_params = dict(wgrp=wgrp, cscale=cscale, cshift=cshift,
                      wz=wz, zscale=zscale, zshift=zshift, wfc=wfc, bfc=bfc)
    return kernel_params, ref_params


def skconv_reference(x, tp, *, M, G):
    """Pure-JAX mirror of the PyTorch forward (eval-mode BN), for validation."""
    B, C, H, W = x.shape
    with jax.default_matmul_precision("float32"):
        feats = []
        for i in range(M):
            dil = i + 1
            w = tp["wgrp"][i][..., None]                 # (C, C//G, 3, 1) OIHW
            y = lax.conv_general_dilated(
                x, w, window_strides=(1, 1),
                padding=((dil, dil), (1, 1)),
                rhs_dilation=(dil, 1),
                dimension_numbers=("NCHW", "OIHW", "NCHW"),
                feature_group_count=G)
            y = y * tp["cscale"][i].reshape(1, C, 1, 1) + tp["cshift"][i].reshape(1, C, 1, 1)
            feats.append(jnp.maximum(y, 0.0))
        feats = jnp.stack(feats, axis=1)                 # (B, M, C, H, W+2)
        feats_U = jnp.sum(feats, axis=1)
        s = jnp.mean(feats_U, axis=(2, 3))               # (B, C)
        z = jnp.maximum(s @ tp["wz"].T * tp["zscale"][None, :] + tp["zshift"][None, :], 0.0)
        logits = jnp.stack([z @ tp["wfc"][i].T + tp["bfc"][i][None, :] for i in range(M)],
                           axis=1)                        # (B, M, C)
        att = jax.nn.softmax(logits, axis=1)
        return jnp.sum(feats * att[:, :, :, None, None], axis=1)


if __name__ == "__main__":
    # SKConv(features=8, M=2, G=2, r=2, stride=1, L=32) -> d = 4
    features, M, G, r, stride, L_min = 8, 2, 2, 2, 1, 32
    d = int(features / r)
    B, H, W = 2, 16, 8

    key = jax.random.PRNGKey(0)
    kx, kp = jax.random.split(key)
    x = jax.random.normal(kx, (B, features, H, W), jnp.float32)
    params, ref_params = init_params(kp, C=features, M=M, G=G, d=d, H=H, W=W)

    out = skconv_forward(x, params, M=M)
    out = jax.block_until_ready(out)

    ref = skconv_reference(x, ref_params, M=M, G=G)
    # bf16 matmul inputs/outputs + approx reciprocal -> slightly looser tolerance
    np.testing.assert_allclose(np.asarray(out), np.asarray(ref), rtol=3e-2, atol=2e-2)
    assert out.shape == (B, features, H, W + 2)
    print("KERNEL_OK")
</pallas_src>

<mosaic_0001>
module attributes {stable_mosaic.version = 11 : i64} {
  func.func @skconv_kernel(%arg0: i32, %arg1: memref<40x512xbf16, #tpu.memory_space<vmem>>, %arg2: memref<16x40xbf16, #tpu.memory_space<vmem>>, %arg3: memref<16x27xf32, #tpu.memory_space<vmem>>, %arg4: memref<8x512xbf16, #tpu.memory_space<vmem>>) attributes {dimension_semantics = [#tpu.dimension_semantics<arbitrary>], iteration_bounds = array<i64: 1>, scalar_prefetch = 0 : i64, scratch_operands = 0 : i64, tpu.core_type = #tpu.core_type<tc>, window_params = [{pipeline_mode = #tpu.pipeline_mode<synchronous>, transform_indices = @transform_0, window_bounds = array<i64: 40, 512>}, {pipeline_mode = #tpu.pipeline_mode<synchronous>, transform_indices = @transform_1, window_bounds = array<i64: 16, 40>}, {pipeline_mode = #tpu.pipeline_mode<synchronous>, transform_indices = @transform_2, window_bounds = array<i64: 16, 27>}, {pipeline_mode = #tpu.pipeline_mode<synchronous>, transform_indices = @transform_3, window_bounds = array<i64: 8, 512>}]} {
    %c0 = arith.constant 0 : index
    %c0_0 = arith.constant 0 : index
    %0 = vector.load %arg1[%c0, %c0_0] : memref<40x512xbf16, #tpu.memory_space<vmem>>, vector<40x512xbf16>
    %c0_1 = arith.constant 0 : index
    %c0_2 = arith.constant 0 : index
    %1 = vector.load %arg3[%c0_1, %c0_2] : memref<16x27xf32, #tpu.memory_space<vmem>>, vector<16x27xf32>
    %2 = vector.extract_strided_slice %1 {offsets = [0, 0], sizes = [16, 16], strides = [1, 1]} : vector<16x27xf32> to vector<16x16xf32>
    %3 = vector.extract_strided_slice %1 {offsets = [0, 16], sizes = [16, 8], strides = [1, 1]} : vector<16x27xf32> to vector<16x8xf32>
    %4 = vector.extract_strided_slice %1 {offsets = [0, 24], sizes = [16, 1], strides = [1, 1]} : vector<16x27xf32> to vector<16x1xf32>
    %5 = vector.extract_strided_slice %1 {offsets = [0, 25], sizes = [16, 1], strides = [1, 1]} : vector<16x27xf32> to vector<16x1xf32>
    %6 = vector.extract_strided_slice %1 {offsets = [0, 26], sizes = [16, 1], strides = [1, 1]} : vector<16x27xf32> to vector<16x1xf32>
    %c0_3 = arith.constant 0 : index
    %c0_4 = arith.constant 0 : index
    %7 = vector.load %arg2[%c0_3, %c0_4] : memref<16x40xbf16, #tpu.memory_space<vmem>>, vector<16x40xbf16>
    %cst = arith.constant dense<0.000000e+00> : vector<16x512xf32>
    %8 = tpu.matmul %7, %0, %cst {dimension_numbers = #tpu.dot_dimension_numbers<[1], [0], [0], [1], [0, 0, 1, 1], [], []>} : vector<16x40xbf16>, vector<40x512xbf16>, vector<16x512xf32> -> vector<16x512xf32>
    %9 = vector.broadcast %4 : vector<16x1xf32> to vector<16x512xf32>
    %10 = arith.addf %8, %9 : vector<16x512xf32>
    %cst_5 = arith.constant 0.000000e+00 : f32
    %11 = vector.broadcast %cst_5 : f32 to vector<16x512xf32>
    %12 = arith.maximumf %10, %11 : vector<16x512xf32>
    %13 = vector.extract_strided_slice %12 {offsets = [0, 0], sizes = [8, 512], strides = [1, 1]} : vector<16x512xf32> to vector<8x512xf32>
    %14 = vector.extract_strided_slice %12 {offsets = [8, 0], sizes = [8, 512], strides = [1, 1]} : vector<16x512xf32> to vector<8x512xf32>
    %15 = arith.addf %13, %14 : vector<8x512xf32>
    %16 = vector.extract_strided_slice %15 {offsets = [0, 0], sizes = [8, 256], strides = [1, 1]} : vector<8x512xf32> to vector<8x256xf32>
    %cst_6 = arith.constant dense<0.000000e+00> : vector<8xf32>
    %17 = vector.multi_reduction <add>, %16, %cst_6 [1] : vector<8x256xf32> to vector<8xf32>
    %18 = vector.shape_cast %17 : vector<8xf32> to vector<8x1xf32>
    %cst_7 = arith.constant dense<0.000000e+00> : vector<16x1xf32>
    %19 = tpu.matmul %3, %18, %cst_7 {dimension_numbers = #tpu.dot_dimension_numbers<[1], [0], [0], [1], [0, 0, 1, 1], [], []>} : vector<16x8xf32>, vector<8x1xf32>, vector<16x1xf32> -> vector<16x1xf32>
    %20 = arith.addf %19, %6 : vector<16x1xf32>
    %cst_8 = arith.constant 0.000000e+00 : f32
    %21 = vector.broadcast %cst_8 : f32 to vector<16x1xf32>
    %22 = arith.maximumf %20, %21 : vector<16x1xf32>
    %cst_9 = arith.constant dense<0.000000e+00> : vector<16x1xf32>
    %23 = tpu.matmul %2, %22, %cst_9 {dimension_numbers = #tpu.dot_dimension_numbers<[1], [0], [0], [1], [0, 0, 1, 1], [], []>} : vector<16x16xf32>, vector<16x1xf32>, vector<16x1xf32> -> vector<16x1xf32>
    %24 = arith.addf %23, %5 : vector<16x1xf32>
    %25 = vector.extract_strided_slice %24 {offsets = [0, 0], sizes = [8, 1], strides = [1, 1]} : vector<16x1xf32> to vector<8x1xf32>
    %26 = vector.extract_strided_slice %24 {offsets = [8, 0], sizes = [8, 1], strides = [1, 1]} : vector<16x1xf32> to vector<8x1xf32>
    %27 = arith.maximumf %25, %26 : vector<8x1xf32>
    %28 = vector.extract_strided_slice %24 {offsets = [0, 0], sizes = [8, 1], strides = [1, 1]} : vector<16x1xf32> to vector<8x1xf32>
    %29 = arith.subf %28, %27 : vector<8x1xf32>
    %30 = math.exp %29 : vector<8x1xf32>
    %31 = vector.extract_strided_slice %24 {offsets = [8, 0], sizes = [8, 1], strides = [1, 1]} : vector<16x1xf32> to vector<8x1xf32>
    %32 = arith.subf %31, %27 : vector<8x1xf32>
    %33 = math.exp %32 : vector<8x1xf32>
    %34 = arith.addf %30, %33 : vector<8x1xf32>
    %35 = tpu.reciprocal %34 {approx = true} : vector<8x1xf32> -> vector<8x1xf32>
    %36 = vector.extract_strided_slice %12 {offsets = [0, 0], sizes = [8, 256], strides = [1, 1]} : vector<16x512xf32> to vector<8x256xf32>
    %37 = arith.mulf %30, %35 : vector<8x1xf32>
    %38 = vector.broadcast %37 : vector<8x1xf32> to vector<8x256xf32>
    %39 = arith.mulf %36, %38 : vector<8x256xf32>
    %40 = vector.extract_strided_slice %12 {offsets = [8, 0], sizes = [8, 256], strides = [1, 1]} : vector<16x512xf32> to vector<8x256xf32>
    %41 = arith.mulf %33, %35 : vector<8x1xf32>
    %42 = vector.broadcast %41 : vector<8x1xf32> to vector<8x256xf32>
    %43 = arith.mulf %40, %42 : vector<8x256xf32>
    %44 = arith.addf %39, %43 : vector<8x256xf32>
    %45 = arith.truncf %44 : vector<8x256xf32> to vector<8x256xbf16>
    %c0_10 = arith.constant 0 : index
    %c0_11 = arith.constant 0 : index
    %46 = vector.load %arg4[%c0_10, %c0_11] : memref<8x512xbf16, #tpu.memory_space<vmem>>, vector<8x256xbf16>
    tpu.vector_store %arg4[%c0_10, %c0_11], %45 {strides = array<i32>} : memref<8x512xbf16, #tpu.memory_space<vmem>>, vector<8x256xbf16>,
    %47 = vector.extract_strided_slice %15 {offsets = [0, 256], sizes = [8, 256], strides = [1, 1]} : vector<8x512xf32> to vector<8x256xf32>
    %cst_12 = arith.constant dense<0.000000e+00> : vector<8xf32>
    %48 = vector.multi_reduction <add>, %47, %cst_12 [1] : vector<8x256xf32> to vector<8xf32>
    %49 = vector.shape_cast %48 : vector<8xf32> to vector<8x1xf32>
    %cst_13 = arith.constant dense<0.000000e+00> : vector<16x1xf32>
    %50 = tpu.matmul %3, %49, %cst_13 {dimension_numbers = #tpu.dot_dimension_numbers<[1], [0], [0], [1], [0, 0, 1, 1], [], []>} : vector<16x8xf32>, vector<8x1xf32>, vector<16x1xf32> -> vector<16x1xf32>
    %51 = arith.addf %50, %6 : vector<16x1xf32>
    %cst_14 = arith.constant 0.000000e+00 : f32
    %52 = vector.broadcast %cst_14 : f32 to vector<16x1xf32>
    %53 = arith.maximumf %51, %52 : vector<16x1xf32>
    %cst_15 = arith.constant dense<0.000000e+00> : vector<16x1xf32>
    %54 = tpu.matmul %2, %53, %cst_15 {dimension_numbers = #tpu.dot_dimension_numbers<[1], [0], [0], [1], [0, 0, 1, 1], [], []>} : vector<16x16xf32>, vector<16x1xf32>, vector<16x1xf32> -> vector<16x1xf32>
    %55 = arith.addf %54, %5 : vector<16x1xf32>
    %56 = vector.extract_strided_slice %55 {offsets = [0, 0], sizes = [8, 1], strides = [1, 1]} : vector<16x1xf32> to vector<8x1xf32>
    %57 = vector.extract_strided_slice %55 {offsets = [8, 0], sizes = [8, 1], strides = [1, 1]} : vector<16x1xf32> to vector<8x1xf32>
    %58 = arith.maximumf %56, %57 : vector<8x1xf32>
    %59 = vector.extract_strided_slice %55 {offsets = [0, 0], sizes = [8, 1], strides = [1, 1]} : vector<16x1xf32> to vector<8x1xf32>
    %60 = arith.subf %59, %58 : vector<8x1xf32>
    %61 = math.exp %60 : vector<8x1xf32>
    %62 = vector.extract_strided_slice %55 {offsets = [8, 0], sizes = [8, 1], strides = [1, 1]} : vector<16x1xf32> to vector<8x1xf32>
    %63 = arith.subf %62, %58 : vector<8x1xf32>
    %64 = math.exp %63 : vector<8x1xf32>
    %65 = arith.addf %61, %64 : vector<8x1xf32>
    %66 = tpu.reciprocal %65 {approx = true} : vector<8x1xf32> -> vector<8x1xf32>
    %67 = vector.extract_strided_slice %12 {offsets = [0, 256], sizes = [8, 256], strides = [1, 1]} : vector<16x512xf32> to vector<8x256xf32>
    %68 = arith.mulf %61, %66 : vector<8x1xf32>
    %69 = vector.broadcast %68 : vector<8x1xf32> to vector<8x256xf32>
    %70 = arith.mulf %67, %69 : vector<8x256xf32>
    %71 = vector.extract_strided_slice %12 {offsets = [8, 256], sizes = [8, 256], strides = [1, 1]} : vector<16x512xf32> to vector<8x256xf32>
    %72 = arith.mulf %64, %66 : vector<8x1xf32>
    %73 = vector.broadcast %72 : vector<8x1xf32> to vector<8x256xf32>
    %74 = arith.mulf %71, %73 : vector<8x256xf32>
    %75 = arith.addf %70, %74 : vector<8x256xf32>
    %76 = arith.truncf %75 : vector<8x256xf32> to vector<8x256xbf16>
    %c0_16 = arith.constant 0 : index
    %c256 = arith.constant 256 : index
    %77 = vector.load %arg4[%c0_16, %c256] : memref<8x512xbf16, #tpu.memory_space<vmem>>, vector<8x256xbf16>
    tpu.vector_store %arg4[%c0_16, %c256], %76 {strides = array<i32>} : memref<8x512xbf16, #tpu.memory_space<vmem>>, vector<8x256xbf16>,
    return
  }
  func.func @transform_0(%arg0: i32) -> (i32, i32) {
    %c0_i32 = arith.constant 0 : i32
    %c0_i32_0 = arith.constant 0 : i32
    %c0_i32_1 = arith.constant 0 : i32
    return %c0_i32, %c0_i32_0 : i32, i32
  }
  func.func @transform_1(%arg0: i32) -> (i32, i32) {
    %c0_i32 = arith.constant 0 : i32
    %c0_i32_0 = arith.constant 0 : i32
    %c0_i32_1 = arith.constant 0 : i32
    return %c0_i32, %c0_i32_0 : i32, i32
  }
  func.func @transform_2(%arg0: i32) -> (i32, i32) {
    %c0_i32 = arith.constant 0 : i32
    %c0_i32_0 = arith.constant 0 : i32
    %c0_i32_1 = arith.constant 0 : i32
    return %c0_i32, %c0_i32_0 : i32, i32
  }
  func.func @transform_3(%arg0: i32) -> (i32, i32) {
    %c0_i32 = arith.constant 0 : i32
    %c0_i32_0 = arith.constant 0 : i32
    %c0_i32_1 = arith.constant 0 : i32
    return %c0_i32, %c0_i32_0 : i32, i32
  }
}

</mosaic_0001>

<llo_original>
// kernel: skconv_forward.1
$region0: #{skconv_forward.1}
  #allocation0 [shape = 'u32[]', space=smem, size = 0x4, offset = 0x4, fixed_abs, tag = 'smem constant byte address 0x4 - core index']
  #allocation1 [shape = 'u32[144,128]{1,0:T(1,128)}', space=vmem, size = 0x12000, scoped, tag = 'internal scratch']
  %s0 = inlined_call_operand.vmem [shape: bf16[40,512], index: 0, kind: input, shape index: {}]
  %s1 = inlined_call_operand.vmem [shape: bf16[16,40], index: 1, kind: input, shape index: {}]
  %s2 = inlined_call_operand.vmem [shape: f32[16,27], index: 2, kind: input, shape index: {}]
  %s3 = inlined_call_operand.vmem [shape: bf16[8,512], index: 3, kind: output, shape index: {}]
  %s4 = sld [smem:[#allocation0]]
  $region22: #{skconv_forward.1} parent=0
    _
  %s6 = ssub.s32 1, %s4
  %s7 = scalar_select 0, %s6, %s4
  // Predicated region
  $region2: #{skconv_forward.1} parent=0 // pred_check
    _
  $region3: #{skconv_forward.1} parent=0 // pred_check_branch
    %9 = sbr.rel (0) target = $region5
  $region4: #{skconv_forward.1} parent=0 // pred_region
    _
  $region5: #{skconv_forward.1} parent=0 // pred_fallthru
    _
  // Predicated region
  $region6: #{skconv_forward.1} parent=0 // pred_check
    _
  $region7: #{skconv_forward.1} parent=0 // pred_check_branch
    %11 = sbr.rel (0) target = $region9
  $region8: #{skconv_forward.1} parent=0 // pred_region
    _
  $region9: #{skconv_forward.1} parent=0 // pred_fallthru
    _
  // Predicated region
  $region10: #{skconv_forward.1} parent=0 // pred_check
    _
  $region11: #{skconv_forward.1} parent=0 // pred_check_branch
    %13 = sbr.rel (0) target = $region13
  $region12: #{skconv_forward.1} parent=0 // pred_region
    _
  $region13: #{skconv_forward.1} parent=0 // pred_fallthru
    _
  %v15 = vld [vmem:[%s0] sm:$0xff]
  %v16 = vld [vmem:[%s0 + $0x8] sm:$0xff]
  %v17 = vld [vmem:[%s0 + $0x10] sm:$0xff]
  %v18 = vld [vmem:[%s0 + $0x18] sm:$0xff]
  %v19 = vld [vmem:[%s0 + $0x20] sm:$0xff]
  %v20 = vld [vmem:[%s0 + $0x28] sm:$0xff]
  %v21 = vld [vmem:[%s0 + $0x30] sm:$0xff]
  %v22 = vld [vmem:[%s0 + $0x38] sm:$0xff]
  %v23 = vld [vmem:[%s0 + $0x40] sm:$0xff]
  %v24 = vld [vmem:[%s0 + $0x48] sm:$0xff]
  %v25 = vld [vmem:[%s2] sm:$0xff]
  %v26 = vld [vmem:[%s2 + $0x8] sm:$0xff]
  %v27 = vld [vmem:[%s1] sm:$0xf]
  %v28 = vld [vmem:[%s1 + $0x4] sm:$0xf]
  %30 = vset.pattern.permute.xlu0 24
  %31 = vperm.xlu0 %30, %v25
  %v32 = vpop.permute.xlu0 %31
  %35 = vset.pattern.permute.xlu0 24
  %36 = vperm.xlu0 %35, %v26
  %v37 = vpop.permute.xlu0 %36
  %v41 = vunpack.c.l.b16 %v27
  %v42 = vunpack.c.l.b16 %v28
  %v43 = vpack.c.b16 %v42, %v41
  %v54 = vunpack.c.l.b16 %v15
  %v55 = vunpack.c.h.b16 %v15
  %v56 = vunpack.c.l.b16 %v16
  %v57 = vunpack.c.h.b16 %v16
  %v58 = vunpack.c.l.b16 %v17
  %v59 = vunpack.c.h.b16 %v17
  %v60 = vunpack.c.l.b16 %v18
  %v61 = vunpack.c.h.b16 %v18
  %v62 = vunpack.c.l.b16 %v19
  %v63 = vunpack.c.h.b16 %v19
  %v64 = vunpack.c.l.b16 %v20
  %v65 = vunpack.c.h.b16 %v20
  %v66 = vunpack.c.l.b16 %v21
  %v67 = vunpack.c.h.b16 %v21
  %v68 = vunpack.c.l.b16 %v22
  %v69 = vunpack.c.h.b16 %v22
  %v70 = vunpack.c.l.b16 %v23
  %v71 = vunpack.c.h.b16 %v23
  %v72 = vunpack.c.l.b16 %v24
  %v73 = vunpack.c.h.b16 %v24
  %v74 = vpack.c.b16 %v58, %v54
  %v75 = vpack.c.b16 %v59, %v55
  %v76 = vpack.c.b16 %v60, %v56
  %v77 = vpack.c.b16 %v61, %v57
  %v78 = vpack.c.b16 %v66, %v62
  %v79 = vpack.c.b16 %v67, %v63
  %v80 = vpack.c.b16 %v68, %v64
  %v81 = vpack.c.b16 %v69, %v65
  %v82 = vpack.c.b16 %v70, %v70
  %v83 = vpack.c.b16 %v71, %v71
  %v84 = vpack.c.b16 %v72, %v72
  %v85 = vpack.c.b16 %v73, %v73
  %vm94 = vcmask 326656
  %v96 = vsel %vm94, %v43, 0
  %vm98 = vcmask 1043456
  %v100 = vsel %vm98, %v82, 0
  %v103 = vsel %vm98, %v83, 0
  %v106 = vsel %vm98, %v84, 0
  %v109 = vsel %vm98, %v85, 0
  %111 = vmatprep.subr.bf16.mxu0 0
  %112 = vmatpush1.bf16.msra.mxu0 0
  %113 = vmatprep.subr.bf16.mxu0 0
  %114 = vmatpush1.bf16.msra.mxu0 0
  %115 = vmatprep.subr.bf16.mxu0 0
  %116 = vmatpush1.bf16.msra.mxu0 0
  %117 = vmatprep.subr.bf16.mxu0 0
  %118 = vmatpush1.bf16.msra.mxu0 0
  %119 = vmatprep.subr.bf16.mxu0 0
  %120 = vmatpush1.bf16.msra.mxu0 0
  %121 = vmatprep.subr.bf16.mxu0 %v103
  %122 = vmatpush1.bf16.msra.mxu0 %v100
  %123 = vmatprep.subr.bf16.mxu0 %v79
  %124 = vmatpush1.bf16.msra.mxu0 %v78
  %125 = vmatprep.subr.bf16.mxu0 %v75
  %126 = vmatpush1.bf16.msra.mxu0 %v74
  %127 = vmatprep.subr.bf16.mxu0 0
  %128 = vmatpush2.bf16.msra.mxu0 0
  %129 = vmatprep.subr.bf16.mxu0 0
  %130 = vmatpush2.bf16.msra.mxu0 0
  %131 = vmatprep.subr.bf16.mxu0 0
  %132 = vmatpush2.bf16.msra.mxu0 0
  %133 = vmatprep.subr.bf16.mxu0 0
  %134 = vmatpush2.bf16.msra.mxu0 0
  %135 = vmatprep.subr.bf16.mxu0 0
  %136 = vmatpush2.bf16.msra.mxu0 0
  %137 = vmatprep.subr.bf16.mxu0 0
  %138 = vmatpush2.bf16.msra.mxu0 0
  %139 = vmatprep.subr.bf16.mxu0 0
  %140 = vmatpush2.bf16.msra.mxu0 0
  %141 = vmatprep.subr.bf16.mxu0 0
  %142 = vmatpush2.bf16.msra.mxu0 0
  %143 = vmatprep.mubr.bf16.mxu0 0
  %144 = vmatmul.mubr.bf16.gmra.mxu0 %v96
  %v145 = vpop.f32.mrf.mxu0
  %v146 = vadd.f32 %v32, %v145
  %v147 = vpop.f32.mrf.mxu0
  %v148 = vadd.f32 %v32, %v147
  %v149 = vpop.f32.mrf.mxu0
  %v150 = vadd.f32 %v37, %v149
  %v151 = vpop.f32.mrf.mxu0
  %v152 = vadd.f32 %v37, %v151
  %153 = vdwg.mxu0
  %154 = vmatprep.subr.bf16.mxu0 0
  %155 = vmatpush1.bf16.msra.mxu0 0
  %156 = vmatprep.subr.bf16.mxu0 0
  %157 = vmatpush1.bf16.msra.mxu0 0
  %158 = vmatprep.subr.bf16.mxu0 0
  %159 = vmatpush1.bf16.msra.mxu0 0
  %160 = vmatprep.subr.bf16.mxu0 0
  %161 = vmatpush1.bf16.msra.mxu0 0
  %162 = vmatprep.subr.bf16.mxu0 0
  %163 = vmatpush1.bf16.msra.mxu0 0
  %164 = vmatprep.subr.bf16.mxu0 %v109
  %165 = vmatpush1.bf16.msra.mxu0 %v106
  %166 = vmatprep.subr.bf16.mxu0 %v81
  %167 = vmatpush1.bf16.msra.mxu0 %v80
  %168 = vmatprep.subr.bf16.mxu0 %v77
  %169 = vmatpush1.bf16.msra.mxu0 %v76
  %170 = vmatprep.subr.bf16.mxu0 0
  %171 = vmatpush2.bf16.msra.mxu0 0
  %172 = vmatprep.subr.bf16.mxu0 0
  %173 = vmatpush2.bf16.msra.mxu0 0
  %174 = vmatprep.subr.bf16.mxu0 0
  %175 = vmatpush2.bf16.msra.mxu0 0
  %176 = vmatprep.subr.bf16.mxu0 0
  %177 = vmatpush2.bf16.msra.mxu0 0
  %178 = vmatprep.subr.bf16.mxu0 0
  %179 = vmatpush2.bf16.msra.mxu0 0
  %180 = vmatprep.subr.bf16.mxu0 0
  %181 = vmatpush2.bf16.msra.mxu0 0
  %182 = vmatprep.subr.bf16.mxu0 0
  %183 = vmatpush2.bf16.msra.mxu0 0
  %184 = vmatprep.subr.bf16.mxu0 0
  %185 = vmatpush2.bf16.msra.mxu0 0
  %186 = vmatprep.mubr.bf16.mxu0 0
  %187 = vmatmul.mubr.bf16.gmra.mxu0 %v96
  %v188 = vpop.f32.mrf.mxu0
  %v189 = vadd.f32 %v32, %v188
  %v190 = vpop.f32.mrf.mxu0
  %v191 = vadd.f32 %v32, %v190
  %v192 = vpop.f32.mrf.mxu0
  %v193 = vadd.f32 %v37, %v192
  %v194 = vpop.f32.mrf.mxu0
  %v195 = vadd.f32 %v37, %v194
  %196 = vdwg.mxu0
  %v197 = vmax.f32 %v146, 0.0
  %v198 = vmax.f32 %v148, 0.0
  %v199 = vmax.f32 %v189, 0.0
  %v200 = vmax.f32 %v191, 0.0
  %v201 = vmax.f32 %v150, 0.0
  %v202 = vmax.f32 %v152, 0.0
  %v203 = vmax.f32 %v193, 0.0
  %v204 = vmax.f32 %v195, 0.0
  %v205 = vadd.f32 %v197, %v201
  %v206 = vadd.f32 %v198, %v202
  %v207 = vadd.f32 %v199, %v203
  %v208 = vadd.f32 %v200, %v204
  %v209 = vadd.f32 %v205, %v206
  %210 = vadd.xlane.f32.xlu0 %v209
  %v211 = vpop.xlane.xlu0 %210
  %212 = vrot.lane.b32.xlu0 %v25, 112
  %v213 = vpop.permute.xlu0 %212
  %214 = vrot.lane.b32.xlu0 %v26, 112
  %v215 = vpop.permute.xlu0 %214
  %216 = vrot.lane.b32.xlu0 %v25, 102
  %v217 = vpop.permute.xlu0 %216
  %218 = vrot.lane.b32.xlu0 %v26, 102
  %v219 = vpop.permute.xlu0 %218
  %vm222 = vcmask 64512
  %v223 = vsel %vm222, %v213, 0
  %v225 = vsel %vm222, %v215, 0
  %227 = vmatprep.subr.mxu0 0.0
  %228 = vmatpush1.msra.mxu0 0.0
  %229 = vmatprep.subr.mxu0 0.0
  %230 = vmatpush1.msra.mxu0 0.0
  %231 = vmatprep.subr.mxu0 0.0
  %232 = vmatpush1.msra.mxu0 0.0
  %233 = vmatprep.subr.mxu0 0.0
  %234 = vmatpush1.msra.mxu0 0.0
  %235 = vmatprep.subr.mxu0 0.0
  %236 = vmatpush1.msra.mxu0 0.0
  %237 = vmatprep.subr.mxu0 0.0
  %238 = vmatpush1.msra.mxu0 0.0
  %239 = vmatprep.subr.mxu0 0.0
  %240 = vmatpush1.msra.mxu0 0.0
  %241 = vmatprep.subr.mxu0 0.0
  %242 = vmatpush1.msra.mxu0 0.0
  %243 = vmatprep.subr.mxu0 0.0
  %244 = vmatpush1.msra.mxu0 0.0
  %245 = vmatprep.subr.mxu0 0.0
  %246 = vmatpush1.msra.mxu0 0.0
  %247 = vmatprep.subr.mxu0 0.0
  %248 = vmatpush1.msra.mxu0 0.0
  %249 = vmatprep.subr.mxu0 0.0
  %250 = vmatpush1.msra.mxu0 0.0
  %251 = vmatprep.subr.mxu0 0.0
  %252 = vmatpush1.msra.mxu0 0.0
  %253 = vmatprep.subr.mxu0 0.0
  %254 = vmatpush1.msra.mxu0 0.0
  %255 = vmatprep.subr.mxu0 0.0
  %256 = vmatpush1.msra.mxu0 0.0
  %257 = vmatprep.subr.mxu0 0.0
  %258 = vmatpush1.msra.mxu0 %v211
  %259 = vmatprep.subr.mxu0 0.0
  %260 = vmatpush2.msra.mxu0 0.0
  %261 = vmatprep.subr.mxu0 0.0
  %262 = vmatpush2.msra.mxu0 0.0
  %263 = vmatprep.subr.mxu0 0.0
  %264 = vmatpush2.msra.mxu0 0.0
  %265 = vmatprep.subr.mxu0 0.0
  %266 = vmatpush2.msra.mxu0 0.0
  %267 = vmatprep.subr.mxu0 0.0
  %268 = vmatpush2.msra.mxu0 0.0
  %269 = vmatprep.subr.mxu0 0.0
  %270 = vmatpush2.msra.mxu0 0.0
  %271 = vmatprep.subr.mxu0 0.0
  %272 = vmatpush2.msra.mxu0 0.0
  %273 = vmatprep.subr.mxu0 0.0
  %274 = vmatpush2.msra.mxu0 0.0
  %275 = vmatprep.subr.mxu0 0.0
  %276 = vmatpush2.msra.mxu0 0.0
  %277 = vmatprep.subr.mxu0 0.0
  %278 = vmatpush2.msra.mxu0 0.0
  %279 = vmatprep.subr.mxu0 0.0
  %280 = vmatpush2.msra.mxu0 0.0
  %281 = vmatprep.subr.mxu0 0.0
  %282 = vmatpush2.msra.mxu0 0.0
  %283 = vmatprep.subr.mxu0 0.0
  %284 = vmatpush2.msra.mxu0 0.0
  %285 = vmatprep.subr.mxu0 0.0
  %286 = vmatpush2.msra.mxu0 0.0
  %287 = vmatprep.subr.mxu0 0.0
  %288 = vmatpush2.msra.mxu0 0.0
  %289 = vmatprep.subr.mxu0 0.0
  %290 = vmatpush2.msra.mxu0 0.0
  %291 = vmatprep.mubr.f32.mxu0 0.0
  %292 = vmatmul.mubr.f32.gmra.mxu0 %v223
  %v293 = vpop.f32.mrf.mxu0
  %v294 = vadd.f32 %v217, %v293
  %v295 = vpop.f32.mrf.mxu0
  %296 = vmatprep.mubr.f32.mxu0 0.0
  %297 = vmatmul.mubr.f32.gmra.mxu0 %v225
  %v298 = vpop.f32.mrf.mxu0
  %v299 = vadd.f32 %v219, %v298
  %v300 = vpop.f32.mrf.mxu0
  %301 = vdwg.mxu0
  %v302 = vmax.f32 %v294, 0.0
  %v303 = vmax.f32 %v299, 0.0
  %304 = vrot.lane.b32.xlu0 %v25, 103
  %v305 = vpop.permute.xlu0 %304
  %306 = vrot.lane.b32.xlu0 %v26, 103
  %v307 = vpop.permute.xlu0 %306
  %vm310 = vcmask 130048
  %v311 = vsel %vm310, %v25, 0
  %v313 = vsel %vm310, %v26, 0
  %315 = vmatprep.subr.mxu0 0.0
  %316 = vmatpush1.msra.mxu0 0.0
  %317 = vmatprep.subr.mxu0 0.0
  %318 = vmatpush1.msra.mxu0 0.0
  %319 = vmatprep.subr.mxu0 0.0
  %320 = vmatpush1.msra.mxu0 0.0
  %321 = vmatprep.subr.mxu0 0.0
  %322 = vmatpush1.msra.mxu0 0.0
  %323 = vmatprep.subr.mxu0 0.0
  %324 = vmatpush1.msra.mxu0 0.0
  %325 = vmatprep.subr.mxu0 0.0
  %326 = vmatpush1.msra.mxu0 0.0
  %327 = vmatprep.subr.mxu0 0.0
  %328 = vmatpush1.msra.mxu0 0.0
  %329 = vmatprep.subr.mxu0 0.0
  %330 = vmatpush1.msra.mxu0 0.0
  %331 = vmatprep.subr.mxu0 0.0
  %332 = vmatpush1.msra.mxu0 0.0
  %333 = vmatprep.subr.mxu0 0.0
  %334 = vmatpush1.msra.mxu0 0.0
  %335 = vmatprep.subr.mxu0 0.0
  %336 = vmatpush1.msra.mxu0 0.0
  %337 = vmatprep.subr.mxu0 0.0
  %338 = vmatpush1.msra.mxu0 0.0
  %339 = vmatprep.subr.mxu0 0.0
  %340 = vmatpush1.msra.mxu0 0.0
  %341 = vmatprep.subr.mxu0 0.0
  %342 = vmatpush1.msra.mxu0 0.0
  %343 = vmatprep.subr.mxu0 0.0
  %344 = vmatpush1.msra.mxu0 %v303
  %345 = vmatprep.subr.mxu0 0.0
  %346 = vmatpush1.msra.mxu0 %v302
  %347 = vmatprep.subr.mxu0 0.0
  %348 = vmatpush2.msra.mxu0 0.0
  %349 = vmatprep.subr.mxu0 0.0
  %350 = vmatpush2.msra.mxu0 0.0
  %351 = vmatprep.subr.mxu0 0.0
  %352 = vmatpush2.msra.mxu0 0.0
  %353 = vmatprep.subr.mxu0 0.0
  %354 = vmatpush2.msra.mxu0 0.0
  %355 = vmatprep.subr.mxu0 0.0
  %356 = vmatpush2.msra.mxu0 0.0
  %357 = vmatprep.subr.mxu0 0.0
  %358 = vmatpush2.msra.mxu0 0.0
  %359 = vmatprep.subr.mxu0 0.0
  %360 = vmatpush2.msra.mxu0 0.0
  %361 = vmatprep.subr.mxu0 0.0
  %362 = vmatpush2.msra.mxu0 0.0
  %363 = vmatprep.subr.mxu0 0.0
  %364 = vmatpush2.msra.mxu0 0.0
  %365 = vmatprep.subr.mxu0 0.0
  %366 = vmatpush2.msra.mxu0 0.0
  %367 = vmatprep.subr.mxu0 0.0
  %368 = vmatpush2.msra.mxu0 0.0
  %369 = vmatprep.subr.mxu0 0.0
  %370 = vmatpush2.msra.mxu0 0.0
  %371 = vmatprep.subr.mxu0 0.0
  %372 = vmatpush2.msra.mxu0 0.0
  %373 = vmatprep.subr.mxu0 0.0
  %374 = vmatpush2.msra.mxu0 0.0
  %375 = vmatprep.subr.mxu0 0.0
  %376 = vmatpush2.msra.mxu0 0.0
  %377 = vmatprep.subr.mxu0 0.0
  %378 = vmatpush2.msra.mxu0 0.0
  %379 = vmatprep.mubr.f32.mxu0 0.0
  %380 = vmatmul.mubr.f32.gmra.mxu0 %v311
  %v381 = vpop.f32.mrf.mxu0
  %v382 = vadd.f32 %v305, %v381
  %v383 = vpop.f32.mrf.mxu0
  %384 = vmatprep.mubr.f32.mxu0 0.0
  %385 = vmatmul.mubr.f32.gmra.mxu0 %v313
  %v386 = vpop.f32.mrf.mxu0
  %v387 = vadd.f32 %v307, %v386
  %v388 = vpop.f32.mrf.mxu0
  %389 = vdwg.mxu0
  %v390 = vmax.f32 %v382, %v387
  %v391 = vsub.f32 %v382, %v390
  %v392 = vmul.f32 %v391, 1.442695
  %v393 = vpow.pop %v392
  %v394 = vsub.f32 %v387, %v390
  %v395 = vmul.f32 %v394, 1.442695
  %v396 = vpow.pop %v395
  %v397 = vadd.f32 %v393, %v396
  %v398 = vrcp.pop %v397
  %v399 = vmul.f32 %v393, %v398
  %401 = vset.pattern.permute.xlu0 0
  %402 = vperm.xlu0 %401, %v399
  %v403 = vpop.permute.xlu0 %402
  %v405 = vmul.f32 %v197, %v403
  %v406 = vmul.f32 %v198, %v403
  %v407 = vmul.f32 %v396, %v398
  %409 = vset.pattern.permute.xlu0 0
  %410 = vperm.xlu0 %409, %v407
  %v411 = vpop.permute.xlu0 %410
  %v413 = vmul.f32 %v201, %v411
  %v414 = vmul.f32 %v202, %v411
  %v415 = vadd.f32 %v405, %v413
  %v416 = vadd.f32 %v406, %v414
  %v417 = vpack.c.bf16 %v415, %v415
  %v418 = vpack.c.bf16 %v416, %v416
  %v421 = vunpack.c.l.b16 %v417
  %v422 = vunpack.c.l.b16 %v418
  %v423 = vpack.c.b16 %v422, %v421
  %425 = vst [vmem:[%s3] sm:$0xff] %v423
  %v426 = vadd.f32 %v207, %v208
  %427 = vadd.xlane.f32.xlu0 %v426
  %v428 = vpop.xlane.xlu0 %427
  %429 = vmatprep.subr.mxu0 0.0
  %430 = vmatpush1.msra.mxu0 0.0
  %431 = vmatprep.subr.mxu0 0.0
  %432 = vmatpush1.msra.mxu0 0.0
  %433 = vmatprep.subr.mxu0 0.0
  %434 = vmatpush1.msra.mxu0 0.0
  %435 = vmatprep.subr.mxu0 0.0
  %436 = vmatpush1.msra.mxu0 0.0
  %437 = vmatprep.subr.mxu0 0.0
  %438 = vmatpush1.msra.mxu0 0.0
  %439 = vmatprep.subr.mxu0 0.0
  %440 = vmatpush1.msra.mxu0 0.0
  %441 = vmatprep.subr.mxu0 0.0
  %442 = vmatpush1.msra.mxu0 0.0
  %443 = vmatprep.subr.mxu0 0.0
  %444 = vmatpush1.msra.mxu0 0.0
  %445 = vmatprep.subr.mxu0 0.0
  %446 = vmatpush1.msra.mxu0 0.0
  %447 = vmatprep.subr.mxu0 0.0
  %448 = vmatpush1.msra.mxu0 0.0
  %449 = vmatprep.subr.mxu0 0.0
  %450 = vmatpush1.msra.mxu0 0.0
  %451 = vmatprep.subr.mxu0 0.0
  %452 = vmatpush1.msra.mxu0 0.0
  %453 = vmatprep.subr.mxu0 0.0
  %454 = vmatpush1.msra.mxu0 0.0
  %455 = vmatprep.subr.mxu0 0.0
  %456 = vmatpush1.msra.mxu0 0.0
  %457 = vmatprep.subr.mxu0 0.0
  %458 = vmatpush1.msra.mxu0 0.0
  %459 = vmatprep.subr.mxu0 0.0
  %460 = vmatpush1.msra.mxu0 %v428
  %461 = vmatprep.subr.mxu0 0.0
  %462 = vmatpush2.msra.mxu0 0.0
  %463 = vmatprep.subr.mxu0 0.0
  %464 = vmatpush2.msra.mxu0 0.0
  %465 = vmatprep.subr.mxu0 0.0
  %466 = vmatpush2.msra.mxu0 0.0
  %467 = vmatprep.subr.mxu0 0.0
  %468 = vmatpush2.msra.mxu0 0.0
  %469 = vmatprep.subr.mxu0 0.0
  %470 = vmatpush2.msra.mxu0 0.0
  %471 = vmatprep.subr.mxu0 0.0
  %472 = vmatpush2.msra.mxu0 0.0
  %473 = vmatprep.subr.mxu0 0.0
  %474 = vmatpush2.msra.mxu0 0.0
  %475 = vmatprep.subr.mxu0 0.0
  %476 = vmatpush2.msra.mxu0 0.0
  %477 = vmatprep.subr.mxu0 0.0
  %478 = vmatpush2.msra.mxu0 0.0
  %479 = vmatprep.subr.mxu0 0.0
  %480 = vmatpush2.msra.mxu0 0.0
  %481 = vmatprep.subr.mxu0 0.0
  %482 = vmatpush2.msra.mxu0 0.0
  %483 = vmatprep.subr.mxu0 0.0
  %484 = vmatpush2.msra.mxu0 0.0
  %485 = vmatprep.subr.mxu0 0.0
  %486 = vmatpush2.msra.mxu0 0.0
  %487 = vmatprep.subr.mxu0 0.0
  %488 = vmatpush2.msra.mxu0 0.0
  %489 = vmatprep.subr.mxu0 0.0
  %490 = vmatpush2.msra.mxu0 0.0
  %491 = vmatprep.subr.mxu0 0.0
  %492 = vmatpush2.msra.mxu0 0.0
  %493 = vmatprep.mubr.f32.mxu0 0.0
  %494 = vmatmul.mubr.f32.gmra.mxu0 %v223
  %v495 = vpop.f32.mrf.mxu0
  %v496 = vadd.f32 %v217, %v495
  %v497 = vpop.f32.mrf.mxu0
  %498 = vmatprep.mubr.f32.mxu0 0.0
  %499 = vmatmul.mubr.f32.gmra.mxu0 %v225
  %v500 = vpop.f32.mrf.mxu0
  %v501 = vadd.f32 %v219, %v500
  %v502 = vpop.f32.mrf.mxu0
  %503 = vdwg.mxu0
  %v504 = vmax.f32 %v496, 0.0
  %v505 = vmax.f32 %v501, 0.0
  %506 = vmatprep.subr.mxu0 0.0
  %507 = vmatpush1.msra.mxu0 0.0
  %508 = vmatprep.subr.mxu0 0.0
  %509 = vmatpush1.msra.mxu0 0.0
  %510 = vmatprep.subr.mxu0 0.0
  %511 = vmatpush1.msra.mxu0 0.0
  %512 = vmatprep.subr.mxu0 0.0
  %513 = vmatpush1.msra.mxu0 0.0
  %514 = vmatprep.subr.mxu0 0.0
  %515 = vmatpush1.msra.mxu0 0.0
  %516 = vmatprep.subr.mxu0 0.0
  %517 = vmatpush1.msra.mxu0 0.0
  %518 = vmatprep.subr.mxu0 0.0
  %519 = vmatpush1.msra.mxu0 0.0
  %520 = vmatprep.subr.mxu0 0.0
  %521 = vmatpush1.msra.mxu0 0.0
  %522 = vmatprep.subr.mxu0 0.0
  %523 = vmatpush1.msra.mxu0 0.0
  %524 = vmatprep.subr.mxu0 0.0
  %525 = vmatpush1.msra.mxu0 0.0
  %526 = vmatprep.subr.mxu0 0.0
  %527 = vmatpush1.msra.mxu0 0.0
  %528 = vmatprep.subr.mxu0 0.0
  %529 = vmatpush1.msra.mxu0 0.0
  %530 = vmatprep.subr.mxu0 0.0
  %531 = vmatpush1.msra.mxu0 0.0
  %532 = vmatprep.subr.mxu0 0.0
  %533 = vmatpush1.msra.mxu0 0.0
  %534 = vmatprep.subr.mxu0 0.0
  %535 = vmatpush1.msra.mxu0 %v505
  %536 = vmatprep.subr.mxu0 0.0
  %537 = vmatpush1.msra.mxu0 %v504
  %538 = vmatprep.subr.mxu0 0.0
  %539 = vmatpush2.msra.mxu0 0.0
  %540 = vmatprep.subr.mxu0 0.0
  %541 = vmatpush2.msra.mxu0 0.0
  %542 = vmatprep.subr.mxu0 0.0
  %543 = vmatpush2.msra.mxu0 0.0
  %544 = vmatprep.subr.mxu0 0.0
  %545 = vmatpush2.msra.mxu0 0.0
  %546 = vmatprep.subr.mxu0 0.0
  %547 = vmatpush2.msra.mxu0 0.0
  %548 = vmatprep.subr.mxu0 0.0
  %549 = vmatpush2.msra.mxu0 0.0
  %550 = vmatprep.subr.mxu0 0.0
  %551 = vmatpush2.msra.mxu0 0.0
  %552 = vmatprep.subr.mxu0 0.0
  %553 = vmatpush2.msra.mxu0 0.0
  %554 = vmatprep.subr.mxu0 0.0
  %555 = vmatpush2.msra.mxu0 0.0
  %556 = vmatprep.subr.mxu0 0.0
  %557 = vmatpush2.msra.mxu0 0.0
  %558 = vmatprep.subr.mxu0 0.0
  %559 = vmatpush2.msra.mxu0 0.0
  %560 = vmatprep.subr.mxu0 0.0
  %561 = vmatpush2.msra.mxu0 0.0
  %562 = vmatprep.subr.mxu0 0.0
  %563 = vmatpush2.msra.mxu0 0.0
  %564 = vmatprep.subr.mxu0 0.0
  %565 = vmatpush2.msra.mxu0 0.0
  %566 = vmatprep.subr.mxu0 0.0
  %567 = vmatpush2.msra.mxu0 0.0
  %568 = vmatprep.subr.mxu0 0.0
  %569 = vmatpush2.msra.mxu0 0.0
  %570 = vmatprep.mubr.f32.mxu0 0.0
  %571 = vmatmul.mubr.f32.gmra.mxu0 %v311
  %v572 = vpop.f32.mrf.mxu0
  %v573 = vadd.f32 %v305, %v572
  %v574 = vpop.f32.mrf.mxu0
  %575 = vmatprep.mubr.f32.mxu0 0.0
  %576 = vmatmul.mubr.f32.gmra.mxu0 %v313
  %v577 = vpop.f32.mrf.mxu0
  %v578 = vadd.f32 %v307, %v577
  %v579 = vpop.f32.mrf.mxu0
  %580 = vdwg.mxu0
  %v581 = vmax.f32 %v573, %v578
  %v582 = vsub.f32 %v573, %v581
  %v583 = vmul.f32 %v582, 1.442695
  %v584 = vpow.pop %v583
  %v585 = vsub.f32 %v578, %v581
  %v586 = vmul.f32 %v585, 1.442695
  %v587 = vpow.pop %v586
  %v588 = vadd.f32 %v584, %v587
  %v589 = vrcp.pop %v588
  %v590 = vmul.f32 %v584, %v589
  %592 = vset.pattern.permute.xlu0 0
  %593 = vperm.xlu0 %592, %v590
  %v594 = vpop.permute.xlu0 %593
  %v596 = vmul.f32 %v199, %v594
  %v597 = vmul.f32 %v200, %v594
  %v598 = vmul.f32 %v587, %v589
  %600 = vset.pattern.permute.xlu0 0
  %601 = vperm.xlu0 %600, %v598
  %v602 = vpop.permute.xlu0 %601
  %v604 = vmul.f32 %v203, %v602
  %v605 = vmul.f32 %v204, %v602
  %v606 = vadd.f32 %v596, %v604
  %v607 = vadd.f32 %v597, %v605
  %v608 = vpack.c.bf16 %v606, %v606
  %v609 = vpack.c.bf16 %v607, %v607
  %v612 = vunpack.c.l.b16 %v608
  %v613 = vunpack.c.l.b16 %v609
  %v614 = vpack.c.b16 %v613, %v612
  %616 = vst [vmem:[%s3 + $0x8] sm:$0xff] %v614
  // Predicated region
  $region14: #{skconv_forward.1} parent=0 // pred_check
    _
  $region15: #{skconv_forward.1} parent=0 // pred_check_branch
    %618 = sbr.rel (0) target = $region17
  $region16: #{skconv_forward.1} parent=0 // pred_region
    _
  $region17: #{skconv_forward.1} parent=0 // pred_fallthru
    _
  // Predicated region
  $region18: #{skconv_forward.1} parent=0 // pred_check
    _
  $region19: #{skconv_forward.1} parent=0 // pred_check_branch
    %620 = sbr.rel (0) target = $region21
  $region20: #{skconv_forward.1} parent=0 // pred_region
    _
  $region21: #{skconv_forward.1} parent=0 // pred_fallthru
    _

</llo_original>
